<compile_context>
chip_gen: v5e
topology: v5e:2x2
jax: 0.10.0
libtpu: 0.0.40
codegen_flags: <defaults>
</compile_context>

<pallas_src>
import jax
import jax.numpy as jnp
from jax.experimental import pallas as pl
from jax.experimental.pallas import tpu as pltpu


HIDDEN = 128            # MLP hidden width (nn.Linear(input_dim, 128))
FUSED = 2 * HIDDEN      # CTR + CVR hidden units, fused side by side


def _round_up(x, m):
    return (x + m - 1) // m * m


def esmm_kernel(h_ref, w1_ref, b1_ref, w2_ref, b2_ref, out_ref):
    """Both MLP towers fused: one MXU matmul + VPU second layer + sigmoids."""
    # Layer 1 (both towers): [TB, D_pad] bf16 @ [D_pad, 256] bf16 -> f32 acc.
    z1 = jnp.dot(h_ref[...], w1_ref[...], preferred_element_type=jnp.float32)
    a1 = jnp.maximum(z1 + b1_ref[...], 0.0)                    # bias + ReLU, f32

    # Layer 2: the two [128, 1] projections done on VPU/XLU (mul + lane reduce)
    # instead of N=1 MXU matmuls.
    prod = a1 * w2_ref[...]                                    # [TB, 256] f32
    logit_ctr = jnp.sum(prod[:, :HIDDEN], axis=-1, keepdims=True) + b2_ref[0]
    logit_cvr = jnp.sum(prod[:, HIDDEN:], axis=-1, keepdims=True) + b2_ref[1]

    p_ctr = jax.nn.sigmoid(logit_ctr)                          # [TB, 1]
    p_cvr = jax.nn.sigmoid(logit_cvr)                          # [TB, 1]

    # Single packed output slab: col 0 = p_ctr, col 1 = p_ctcvr.
    out_ref[...] = jnp.concatenate([p_ctr, p_ctr * p_cvr], axis=-1)


def pack_params(params, input_dim, compute_dtype=jnp.bfloat16):
    """Fuse / pad / cast the tower weights once, outside the kernel."""
    d_pad = _round_up(max(input_dim, 128), 128)

    # Fused first layer: [D, 256] -> pad K to d_pad with zero rows, cast bf16.
    w1 = jnp.concatenate([params["w1_ctr"], params["w1_cvr"]], axis=1)
    w1 = jnp.pad(w1, ((0, d_pad - input_dim), (0, 0))).astype(compute_dtype)
    b1 = jnp.concatenate([params["b1_ctr"], params["b1_cvr"]], axis=1)   # [1,256] f32

    # Fused second layer as a single [1, 256] row (VPU path) + (2,) scalar bias.
    w2 = jnp.concatenate([params["w2_ctr"].reshape(1, HIDDEN),
                          params["w2_cvr"].reshape(1, HIDDEN)], axis=1)  # [1,256] f32
    b2 = jnp.concatenate([params["b2_ctr"].reshape(1),
                          params["b2_cvr"].reshape(1)])                  # [2]   f32

    return {"w1": w1, "b1": b1, "w2": w2, "b2": b2, "d_pad": d_pad}


def esmm_forward(h, packed, *, max_tile_b=512, compute_dtype=jnp.bfloat16):
    """h: [B, D] float32 features (embedding concat). Returns (p_ctr, p_ctcvr)."""
    B, D = h.shape
    d_pad = packed["d_pad"]

    # Pad feature dim (zero columns match zero weight rows -> no effect), cast bf16.
    h = jnp.pad(h, ((0, 0), (0, d_pad - D))).astype(compute_dtype)

    # Batch tile sized for v7x's smaller VMEM; padded rows are sliced off below.
    tb = min(max_tile_b, _round_up(B, 8))
    b_pad = _round_up(B, tb)
    if b_pad != B:
        h = jnp.pad(h, ((0, b_pad - B), (0, 0)))
    nb = b_pad // tb

    out = pl.pallas_call(
        esmm_kernel,
        out_shape=jax.ShapeDtypeStruct((b_pad, 2), jnp.float32),
        grid_spec=pltpu.PrefetchScalarGridSpec(
            num_scalar_prefetch=0,
            grid=(nb,),
            in_specs=[
                pl.BlockSpec((tb, d_pad), lambda i: (i, 0)),        # h tile (streamed)
                pl.BlockSpec((d_pad, FUSED), lambda i: (0, 0)),     # fused w1 (resident)
                pl.BlockSpec((1, FUSED), lambda i: (0, 0)),         # fused b1 (resident)
                pl.BlockSpec((1, FUSED), lambda i: (0, 0)),         # fused w2 row (resident)
                pl.BlockSpec(memory_space=pltpu.MemorySpace.SMEM),  # b2 scalars
            ],
            out_specs=pl.BlockSpec((tb, 2), lambda i: (i, 0)),
        ),
        compiler_params=pltpu.CompilerParams(
            dimension_semantics=("parallel",),
            vmem_limit_bytes=32 * 1024 * 1024,
        ),
    )(h, packed["w1"], packed["b1"], packed["w2"], packed["b2"])

    p_ctr = out[:B, 0:1]
    p_ctcvr = out[:B, 1:2]
    return p_ctr, p_ctcvr


def init_params(key, embedding_sizes):
    """Deterministic synthetic parameter init (PyTorch-style uniform bounds)."""
    input_dim = sum(d for _, d in embedding_sizes)
    keys = jax.random.split(key, 4 + len(embedding_sizes))

    # Embedding tables (nn.Embedding default: N(0, 1)).
    tables = [
        jax.random.normal(keys[i], (n, d), dtype=jnp.float32)
        for i, (n, d) in enumerate(embedding_sizes)
    ]

    def linear(k, fan_in, fan_out):
        # Stored already transposed to [in, out] so the kernel does h @ W.
        bound = 1.0 / jnp.sqrt(fan_in)
        kw, kb = jax.random.split(k)
        w = jax.random.uniform(kw, (fan_in, fan_out), jnp.float32, -bound, bound)
        b = jax.random.uniform(kb, (1, fan_out), jnp.float32, -bound, bound)
        return w, b

    w1_ctr, b1_ctr = linear(keys[-4], input_dim, HIDDEN)
    w2_ctr, b2_ctr = linear(keys[-3], HIDDEN, 1)
    w1_cvr, b1_cvr = linear(keys[-2], input_dim, HIDDEN)
    w2_cvr, b2_cvr = linear(keys[-1], HIDDEN, 1)

    params = dict(w1_ctr=w1_ctr, b1_ctr=b1_ctr, w2_ctr=w2_ctr, b2_ctr=b2_ctr,
                  w1_cvr=w1_cvr, b1_cvr=b1_cvr, w2_cvr=w2_cvr, b2_cvr=b2_cvr)
    return tables, params, input_dim


def feature_extractor(tables, category_inputs):
    """Embedding lookup + concat (glue, plain JAX).  category_inputs: [B, F] int32."""
    h = [tables[i][category_inputs[:, i]] for i in range(len(tables))]
    return jnp.concatenate(h, axis=1)  # [B, input_dim]


def esmm_reference(h, params, compute_dtype=jnp.float32):
    """Pure-JAX reference of the two towers (layer 2 done as mul+reduce in f32)."""
    hc = h.astype(compute_dtype)

    def tower(w1, b1, w2, b2):
        z1 = jnp.dot(hc, w1.astype(compute_dtype),
                     preferred_element_type=jnp.float32) + b1
        a1 = jnp.maximum(z1, 0.0)
        logit = jnp.sum(a1 * w2.reshape(1, -1), axis=-1, keepdims=True) + b2
        return jax.nn.sigmoid(logit)

    p_ctr = tower(params["w1_ctr"], params["b1_ctr"],
                  params["w2_ctr"], params["b2_ctr"])
    p_cvr = tower(params["w1_cvr"], params["b1_cvr"],
                  params["w2_cvr"], params["b2_cvr"])
    return p_ctr, p_ctr * p_cvr


if __name__ == "__main__":
    # Small synthetic config: 3 categorical features.
    embedding_sizes = [(10, 8), (20, 8), (15, 16)]   # input_dim = 32
    batch = 8

    key = jax.random.PRNGKey(0)
    k_params, k_inputs = jax.random.split(key)

    tables, params, input_dim = init_params(k_params, embedding_sizes)

    # Integer categorical inputs, one column per embedding table.
    cols = []
    ks = jax.random.split(k_inputs, len(embedding_sizes))
    for kk, (n, _) in zip(ks, embedding_sizes):
        cols.append(jax.random.randint(kk, (batch, 1), 0, n, dtype=jnp.int32))
    category_inputs = jnp.concatenate(cols, axis=1)   # [B, F]

    h = feature_extractor(tables, category_inputs)    # [B, input_dim]

    packed = pack_params(params, input_dim)
    p_ctr, p_ctcvr = esmm_forward(h, packed)
    p_ctr = jax.block_until_ready(p_ctr)
    p_ctcvr = jax.block_until_ready(p_ctcvr)

    assert p_ctr.shape == (batch, 1) and p_ctcvr.shape == (batch, 1)

    # Tight check vs a bf16-matched reference (same layer-1 input dtype).
    r_ctr_bf16, r_ctcvr_bf16 = esmm_reference(h, params, compute_dtype=jnp.bfloat16)
    assert jnp.allclose(p_ctr, r_ctr_bf16, atol=1e-4, rtol=1e-4)
    assert jnp.allclose(p_ctcvr, r_ctcvr_bf16, atol=1e-4, rtol=1e-4)

    # Loose check vs the full-f32 reference (bounds the bf16 quantization error).
    r_ctr_f32, r_ctcvr_f32 = esmm_reference(h, params, compute_dtype=jnp.float32)
    assert jnp.allclose(p_ctr, r_ctr_f32, atol=3e-2)
    assert jnp.allclose(p_ctcvr, r_ctcvr_f32, atol=3e-2)

    print("KERNEL_OK")
</pallas_src>

<mosaic_0001>
module attributes {stable_mosaic.version = 11 : i64} {
  func.func @esmm_kernel(%arg0: i32, %arg1: memref<8x128xbf16, #tpu.memory_space<vmem>>, %arg2: memref<128x256xbf16, #tpu.memory_space<vmem>>, %arg3: memref<1x256xf32, #tpu.memory_space<vmem>>, %arg4: memref<1x256xf32, #tpu.memory_space<vmem>>, %arg5: memref<2xf32, #tpu.memory_space<smem>>, %arg6: memref<8x2xf32, #tpu.memory_space<vmem>>) attributes {dimension_semantics = [#tpu.dimension_semantics<parallel>], iteration_bounds = array<i64: 1>, scalar_prefetch = 0 : i64, scratch_operands = 0 : i64, tpu.core_type = #tpu.core_type<tc>, window_params = [{transform_indices = @transform_0, window_bounds = array<i64: 8, 128>}, {pipeline_mode = #tpu.pipeline_mode<synchronous>, transform_indices = @transform_1, window_bounds = array<i64: 128, 256>}, {pipeline_mode = #tpu.pipeline_mode<synchronous>, transform_indices = @transform_2, window_bounds = array<i64: 1, 256>}, {pipeline_mode = #tpu.pipeline_mode<synchronous>, transform_indices = @transform_3, window_bounds = array<i64: 1, 256>}, {transform_indices = @transform_4, window_bounds = array<i64: 2>}, {transform_indices = @transform_5, window_bounds = array<i64: 8, 2>}]} {
    %c0 = arith.constant 0 : index
    %c0_0 = arith.constant 0 : index
    %0 = vector.load %arg1[%c0, %c0_0] : memref<8x128xbf16, #tpu.memory_space<vmem>>, vector<8x128xbf16>
    %c0_1 = arith.constant 0 : index
    %c0_2 = arith.constant 0 : index
    %1 = vector.load %arg2[%c0_1, %c0_2] : memref<128x256xbf16, #tpu.memory_space<vmem>>, vector<128x256xbf16>
    %cst = arith.constant dense<0.000000e+00> : vector<8x256xf32>
    %2 = tpu.matmul %0, %1, %cst {dimension_numbers = #tpu.dot_dimension_numbers<[1], [0], [0], [1], [0, 0, 1, 1], [], []>} : vector<8x128xbf16>, vector<128x256xbf16>, vector<8x256xf32> -> vector<8x256xf32>
    %c0_3 = arith.constant 0 : index
    %c0_4 = arith.constant 0 : index
    %3 = vector.load %arg3[%c0_3, %c0_4] : memref<1x256xf32, #tpu.memory_space<vmem>>, vector<1x256xf32>
    %4 = vector.broadcast %3 : vector<1x256xf32> to vector<8x256xf32>
    %5 = arith.addf %2, %4 : vector<8x256xf32>
    %cst_5 = arith.constant 0.000000e+00 : f32
    %6 = vector.broadcast %cst_5 : f32 to vector<8x256xf32>
    %7 = arith.maximumf %5, %6 : vector<8x256xf32>
    %c0_6 = arith.constant 0 : index
    %c0_7 = arith.constant 0 : index
    %8 = vector.load %arg4[%c0_6, %c0_7] : memref<1x256xf32, #tpu.memory_space<vmem>>, vector<1x256xf32>
    %9 = vector.broadcast %8 : vector<1x256xf32> to vector<8x256xf32>
    %10 = arith.mulf %7, %9 : vector<8x256xf32>
    %11 = vector.extract_strided_slice %10 {offsets = [0, 0], sizes = [8, 128], strides = [1, 1]} : vector<8x256xf32> to vector<8x128xf32>
    %cst_8 = arith.constant dense<0.000000e+00> : vector<8xf32>
    %12 = vector.multi_reduction <add>, %11, %cst_8 [1] : vector<8x128xf32> to vector<8xf32>
    %13 = vector.shape_cast %12 : vector<8xf32> to vector<8x1xf32>
    %c0_9 = arith.constant 0 : index
    %14 = memref.load %arg5[%c0_9] : memref<2xf32, #tpu.memory_space<smem>>
    %15 = vector.broadcast %14 : f32 to vector<8x1xf32>
    %16 = arith.addf %13, %15 : vector<8x1xf32>
    %17 = vector.extract_strided_slice %10 {offsets = [0, 128], sizes = [8, 128], strides = [1, 1]} : vector<8x256xf32> to vector<8x128xf32>
    %cst_10 = arith.constant dense<0.000000e+00> : vector<8xf32>
    %18 = vector.multi_reduction <add>, %17, %cst_10 [1] : vector<8x128xf32> to vector<8xf32>
    %19 = vector.shape_cast %18 : vector<8xf32> to vector<8x1xf32>
    %c1 = arith.constant 1 : index
    %20 = memref.load %arg5[%c1] : memref<2xf32, #tpu.memory_space<smem>>
    %21 = vector.broadcast %20 : f32 to vector<8x1xf32>
    %22 = arith.addf %19, %21 : vector<8x1xf32>
    %23 = arith.negf %16 : vector<8x1xf32>
    %24 = math.exp %23 : vector<8x1xf32>
    %cst_11 = arith.constant 1.000000e+00 : f32
    %25 = vector.broadcast %cst_11 : f32 to vector<8x1xf32>
    %26 = arith.addf %25, %24 : vector<8x1xf32>
    %27 = arith.divf %25, %26 : vector<8x1xf32>
    %28 = arith.negf %22 : vector<8x1xf32>
    %29 = math.exp %28 : vector<8x1xf32>
    %cst_12 = arith.constant 1.000000e+00 : f32
    %30 = vector.broadcast %cst_12 : f32 to vector<8x1xf32>
    %31 = arith.addf %30, %29 : vector<8x1xf32>
    %32 = arith.divf %30, %31 : vector<8x1xf32>
    %33 = arith.mulf %27, %32 : vector<8x1xf32>
    %34 = tpu.concatenate %27, %33 in 1 : vector<8x1xf32>, vector<8x1xf32> -> vector<8x2xf32>
    %c0_13 = arith.constant 0 : index
    %c0_14 = arith.constant 0 : index
    %35 = vector.load %arg6[%c0_13, %c0_14] : memref<8x2xf32, #tpu.memory_space<vmem>>, vector<8x2xf32>
    tpu.vector_store %arg6[%c0_13, %c0_14], %34 {strides = array<i32>} : memref<8x2xf32, #tpu.memory_space<vmem>>, vector<8x2xf32>,
    return
  }
  func.func @transform_0(%arg0: i32) -> (i32, i32) {
    %c0_i32 = arith.constant 0 : i32
    %c0_i32_0 = arith.constant 0 : i32
    return %arg0, %c0_i32 : i32, i32
  }
  func.func @transform_1(%arg0: i32) -> (i32, i32) {
    %c0_i32 = arith.constant 0 : i32
    %c0_i32_0 = arith.constant 0 : i32
    %c0_i32_1 = arith.constant 0 : i32
    return %c0_i32, %c0_i32_0 : i32, i32
  }
  func.func @transform_2(%arg0: i32) -> (i32, i32) {
    %c0_i32 = arith.constant 0 : i32
    %c0_i32_0 = arith.constant 0 : i32
    %c0_i32_1 = arith.constant 0 : i32
    return %c0_i32, %c0_i32_0 : i32, i32
  }
  func.func @transform_3(%arg0: i32) -> (i32, i32) {
    %c0_i32 = arith.constant 0 : i32
    %c0_i32_0 = arith.constant 0 : i32
    %c0_i32_1 = arith.constant 0 : i32
    return %c0_i32, %c0_i32_0 : i32, i32
  }
  func.func @transform_4(%arg0: i32) -> i32 {
    %c0_i32 = arith.constant 0 : i32
    %c0_i32_0 = arith.constant 0 : i32
    return %c0_i32 : i32
  }
  func.func @transform_5(%arg0: i32) -> (i32, i32) {
    %c0_i32 = arith.constant 0 : i32
    %c0_i32_0 = arith.constant 0 : i32
    return %arg0, %c0_i32 : i32, i32
  }
}

</mosaic_0001>

<llo_original>
// kernel: tpu_custom_call.1
$region0: #{tpu_custom_call.1}
  #allocation0 [shape = 'u32[]', space=smem, size = 0x4, offset = 0x4, fixed_abs, tag = 'smem constant byte address 0x4 - core index']
  #allocation1 [shape = 'u32[72,128]{1,0:T(1,128)}', space=vmem, size = 0x9000, scoped, tag = 'internal scratch']
  %s0 = inlined_call_operand.hbm [shape: bf16[8,128], index: 0, kind: input, shape index: {}]
  %s1 = inlined_call_operand.hbm [shape: bf16[128,256], index: 1, kind: input, shape index: {}]
  %s2 = inlined_call_operand.hbm [shape: f32[1,256], index: 2, kind: input, shape index: {}]
  %s3 = inlined_call_operand.vmem [shape: f32[1,256], index: 3, kind: input, shape index: {}]
  %s4 = inlined_call_operand.vmem [shape: f32[2], index: 4, kind: input, shape index: {}]
  %s5 = inlined_call_operand.vmem [shape: f32[8,2], index: 5, kind: output, shape index: {}]
  %s6 = sld [smem:[#allocation0]]
  $region46: #{tpu_custom_call.1} parent=0
    _
  %s8 = ssub.s32 1, %s6
  %s9 = scalar_select 0, %s8, %s6
  $region1: #{tpu_custom_call.1} parent=0
    #allocation2 [shape = 'u8[2048]{0}', space=vmem, size = 0x800, scoped, tag = 'input window, operand 0, single buffered']
    #allocation3 [shape = 's32[1]{0}', space=sflag, size = 0x4, scoped, tag = 'scoped memory for tpu_custom_call.1']
    #allocation4 [shape = 's32[1]{0}', space=sflag, size = 0x4, scoped, tag = 'scoped memory for tpu_custom_call.1']
    #allocation5 [shape = 'u8[65536]{0}', space=vmem, size = 0x10000, scoped, tag = 'input window, operand 1, single buffered']
    #allocation6 [shape = 's32[1]{0}', space=sflag, size = 0x4, scoped, tag = 'scoped memory for tpu_custom_call.1']
    #allocation7 [shape = 'u8[1024]{0}', space=vmem, size = 0x400, scoped, tag = 'input window, operand 2, single buffered']
    #allocation8 [shape = 'u8[512]{0}', space=smem, size = 0x200, scoped, tag = 'input window, operand 4, single buffered']
    %10 = vsyncpa [#allocation3], 0
    %11 = vsyncpa [#allocation6], 0
    %12 = vsyncpa [#allocation4], 0
    // Predicated region
    $region2: #{tpu_custom_call.1} parent=1 // pred_check
      _
    $region3: #{tpu_custom_call.1} parent=1 // pred_check_branch
      %14 = sbr.rel (0) target = $region5
    $region4: #{tpu_custom_call.1} parent=1 // pred_region
      %16 = vsyncadd [#allocation3], 0
      %s18 = sshll.u32 %s0, 4
      %s19 = int_to_ptr.hbm [resolvable:$true] %s18
      %s20 = sshll.u32 [#allocation2], 4
      %s21 = int_to_ptr.vmem [resolvable:$true] %s20
      %23 = dma.hbm_to_vmem [thread:$0]  %s19, 64, %s21, [#allocation3]
    $region5: #{tpu_custom_call.1} parent=1 // pred_fallthru
      _
    // Predicated region
    $region6: #{tpu_custom_call.1} parent=1 // pred_check
      _
    $region7: #{tpu_custom_call.1} parent=1 // pred_check_branch
      %25 = sbr.rel (0) target = $region9
    $region8: #{tpu_custom_call.1} parent=1 // pred_region
      %27 = vsyncadd [#allocation6], 0
      %s28 = sshll.u32 %s1, 4
      %s29 = int_to_ptr.hbm [resolvable:$true] %s28
      %s30 = sshll.u32 [#allocation5], 4
      %s31 = int_to_ptr.vmem [resolvable:$true] %s30
      %36 = dma.hbm_to_vmem [thread:$0]  %s29, 2048, %s31, [#allocation6], 128, 128, 8
    $region9: #{tpu_custom_call.1} parent=1 // pred_fallthru
      _
    // Predicated region
    $region10: #{tpu_custom_call.1} parent=1 // pred_check
      _
    $region11: #{tpu_custom_call.1} parent=1 // pred_check_branch
      %38 = sbr.rel (0) target = $region13
    $region12: #{tpu_custom_call.1} parent=1 // pred_region
      %40 = vsyncadd [#allocation6], 0
      %s42 = sshll.u32 %s2, 4
      %s43 = int_to_ptr.hbm [resolvable:$true] %s42
      %s44 = sshll.u32 [#allocation7], 4
      %s45 = int_to_ptr.vmem [resolvable:$true] %s44
      %47 = dma.hbm_to_vmem [thread:$0]  %s43, 32, %s45, [#allocation6]
    $region13: #{tpu_custom_call.1} parent=1 // pred_fallthru
      _
    // Predicated region
    $region14: #{tpu_custom_call.1} parent=1 // pred_check
      _
    $region15: #{tpu_custom_call.1} parent=1 // pred_check_branch
      %49 = sbr.rel (0) target = $region17
    $region16: #{tpu_custom_call.1} parent=1 // pred_region
      _
    $region17: #{tpu_custom_call.1} parent=1 // pred_fallthru
      _
    // Predicated region
    $region18: #{tpu_custom_call.1} parent=1 // pred_check
      _
    $region19: #{tpu_custom_call.1} parent=1 // pred_check_branch
      %51 = sbr.rel (0) target = $region21
    $region20: #{tpu_custom_call.1} parent=1 // pred_region
      %53 = vsyncadd [#allocation4], 0
      %s55 = sshll.u32 %s4, 4
      %s56 = int_to_ptr.vmem [resolvable:$true] %s55
      %58 = dma.vmem_to_smem %s56, 16, [#allocation8], [#allocation4]
    $region21: #{tpu_custom_call.1} parent=1 // pred_fallthru
      _
    // Predicated region
    $region22: #{tpu_custom_call.1} parent=1 // pred_check
      _
    $region23: #{tpu_custom_call.1} parent=1 // pred_check_branch
      %60 = sbr.rel (0) target = $region25
    $region24: #{tpu_custom_call.1} parent=1 // pred_region
      %62 = dma.done [#allocation3], 64
    $region25: #{tpu_custom_call.1} parent=1 // pred_fallthru
      _
    // Predicated region
    $region26: #{tpu_custom_call.1} parent=1 // pred_check
      _
    $region27: #{tpu_custom_call.1} parent=1 // pred_check_branch
      %64 = sbr.rel (0) target = $region29
    $region28: #{tpu_custom_call.1} parent=1 // pred_region
      %66 = dma.done [#allocation6], 2048
    $region29: #{tpu_custom_call.1} parent=1 // pred_fallthru
      _
    // Predicated region
    $region30: #{tpu_custom_call.1} parent=1 // pred_check
      _
    $region31: #{tpu_custom_call.1} parent=1 // pred_check_branch
      %68 = sbr.rel (0) target = $region33
    $region32: #{tpu_custom_call.1} parent=1 // pred_region
      %70 = dma.done [#allocation6], 32
    $region33: #{tpu_custom_call.1} parent=1 // pred_fallthru
      _
    // Predicated region
    $region34: #{tpu_custom_call.1} parent=1 // pred_check
      _
    $region35: #{tpu_custom_call.1} parent=1 // pred_check_branch
      %72 = sbr.rel (0) target = $region37
    $region36: #{tpu_custom_call.1} parent=1 // pred_region
      %74 = dma.done [#allocation4], 16
    $region37: #{tpu_custom_call.1} parent=1 // pred_fallthru
      _
    %75 = sfence
    %v76 = vld [vmem:[#allocation2] sm:$0xf]
    %v77 = vld [vmem:[#allocation5] sm:$0xff]
    %v78 = vld [vmem:[#allocation5 + $0x8] sm:$0xff]
    %v79 = vld [vmem:[#allocation5 + $0x10] sm:$0xff]
    %v80 = vld [vmem:[#allocation5 + $0x18] sm:$0xff]
    %v81 = vld [vmem:[#allocation5 + $0x20] sm:$0xff]
    %v82 = vld [vmem:[#allocation5 + $0x28] sm:$0xff]
    %v83 = vld [vmem:[#allocation5 + $0x30] sm:$0xff]
    %v84 = vld [vmem:[#allocation5 + $0x38] sm:$0xff]
    %v85 = vld [vmem:[#allocation5 + $0x40] sm:$0xff]
    %v86 = vld [vmem:[#allocation5 + $0x48] sm:$0xff]
    %v87 = vld [vmem:[#allocation5 + $0x50] sm:$0xff]
    %v88 = vld [vmem:[#allocation5 + $0x58] sm:$0xff]
    %v89 = vld [vmem:[#allocation5 + $0x60] sm:$0xff]
    %v90 = vld [vmem:[#allocation5 + $0x68] sm:$0xff]
    %v91 = vld [vmem:[#allocation5 + $0x70] sm:$0xff]
    %v92 = vld [vmem:[#allocation5 + $0x78] sm:$0xff]
    %v93 = vld [vmem:[#allocation7] sm:$0x3]
    %v95 = vperm.slane %v93, 0
    %v96 = vperm.slane %v93, 1
    %v115 = vunpack.c.l.b16 %v77
    %v116 = vunpack.c.h.b16 %v77
    %v117 = vunpack.c.l.b16 %v78
    %v118 = vunpack.c.h.b16 %v78
    %v119 = vunpack.c.l.b16 %v79
    %v120 = vunpack.c.h.b16 %v79
    %v121 = vunpack.c.l.b16 %v80
    %v122 = vunpack.c.h.b16 %v80
    %v123 = vunpack.c.l.b16 %v81
    %v124 = vunpack.c.h.b16 %v81
    %v125 = vunpack.c.l.b16 %v82
    %v126 = vunpack.c.h.b16 %v82
    %v127 = vunpack.c.l.b16 %v83
    %v128 = vunpack.c.h.b16 %v83
    %v129 = vunpack.c.l.b16 %v84
    %v130 = vunpack.c.h.b16 %v84
    %v131 = vunpack.c.l.b16 %v85
    %v132 = vunpack.c.h.b16 %v85
    %v133 = vunpack.c.l.b16 %v86
    %v134 = vunpack.c.h.b16 %v86
    %v135 = vunpack.c.l.b16 %v87
    %v136 = vunpack.c.h.b16 %v87
    %v137 = vunpack.c.l.b16 %v88
    %v138 = vunpack.c.h.b16 %v88
    %v139 = vunpack.c.l.b16 %v89
    %v140 = vunpack.c.h.b16 %v89
    %v141 = vunpack.c.l.b16 %v90
    %v142 = vunpack.c.h.b16 %v90
    %v143 = vunpack.c.l.b16 %v91
    %v144 = vunpack.c.h.b16 %v91
    %v145 = vunpack.c.l.b16 %v92
    %v146 = vunpack.c.h.b16 %v92
    %v147 = vpack.c.b16 %v117, %v115
    %v148 = vpack.c.b16 %v118, %v116
    %v149 = vpack.c.b16 %v121, %v119
    %v150 = vpack.c.b16 %v122, %v120
    %v151 = vpack.c.b16 %v125, %v123
    %v152 = vpack.c.b16 %v126, %v124
    %v153 = vpack.c.b16 %v129, %v127
    %v154 = vpack.c.b16 %v130, %v128
    %v155 = vpack.c.b16 %v133, %v131
    %v156 = vpack.c.b16 %v134, %v132
    %v157 = vpack.c.b16 %v137, %v135
    %v158 = vpack.c.b16 %v138, %v136
    %v159 = vpack.c.b16 %v141, %v139
    %v160 = vpack.c.b16 %v142, %v140
    %v161 = vpack.c.b16 %v145, %v143
    %v162 = vpack.c.b16 %v146, %v144
    %179 = vmatpush.bf16.msra.mxu0 %v161
    %180 = vmatpush.bf16.msra.mxu0 %v159
    %181 = vmatpush.bf16.msra.mxu0 %v157
    %182 = vmatpush.bf16.msra.mxu0 %v155
    %183 = vmatpush.bf16.msra.mxu0 %v153
    %184 = vmatpush.bf16.msra.mxu0 %v151
    %185 = vmatpush.bf16.msra.mxu0 %v149
    %186 = vmatpush.bf16.msra.mxu0 %v147
    %187 = vmatmul.bf16.gmra.mxu0 %v76
    %v188 = vpop.f32.mrf.mxu0
    %v189 = vadd.f32 %v95, %v188
    %v190 = vpop.f32.mrf.mxu0
    %191 = vdwg.mxu0
    %192 = vmatpush.bf16.msra.mxu0 %v162
    %193 = vmatpush.bf16.msra.mxu0 %v160
    %194 = vmatpush.bf16.msra.mxu0 %v158
    %195 = vmatpush.bf16.msra.mxu0 %v156
    %196 = vmatpush.bf16.msra.mxu0 %v154
    %197 = vmatpush.bf16.msra.mxu0 %v152
    %198 = vmatpush.bf16.msra.mxu0 %v150
    %199 = vmatpush.bf16.msra.mxu0 %v148
    %200 = vmatmul.bf16.gmra.mxu0 %v76
    %v201 = vpop.f32.mrf.mxu0
    %v202 = vadd.f32 %v96, %v201
    %v203 = vpop.f32.mrf.mxu0
    %204 = vdwg.mxu0
    %v205 = vmax.f32 %v189, 0.0
    %v206 = vmax.f32 %v202, 0.0
    %v207 = vld [vmem:[%s3] sm:$0x3]
    %v209 = vperm.slane %v207, 0
    %v210 = vperm.slane %v207, 1
    %v213 = vmul.f32 %v205, %v209
    %v214 = vmul.f32 %v206, %v210
    %215 = vadd.xlane.f32.xlu0 %v213
    %v216 = vpop.xlane.xlu0 %215
    %s217 = sld [smem:[#allocation8]]
    %v218 = vstv %s217
    %v219 = vadd.f32 %v216, %v218
    %220 = vadd.xlane.f32.xlu0 %v214
    %v221 = vpop.xlane.xlu0 %220
    %s222 = sld [smem:[#allocation8 + $0x1]]
    %v223 = vstv %s222
    %v224 = vadd.f32 %v221, %v223
    %v225 = vxor.u32 %v219, 2147483648
    %v226 = vmul.f32 %v225, 1.442695
    %v227 = vpow.pop %v226
    %v228 = vadd.f32 %v227, 1.0
    %v229 = vrcp.pop %v228
    %v230 = vmul.f32 %v228, %v229
    %v231 = vsub.f32 1.0, %v230
    %v232 = vmul.f32 %v229, %v231
    %v233 = vadd.f32 %v229, %v232
    %vm234 = vweird.f32 %v228
    %vm235 = vweird.f32 %v229
    %vm236 = vmor %vm234, %vm235
    %v237 = vsel %vm236, %v229, %v233
    %v238 = vand.u32 2147483647, %v228
    %vm239 = vcmp.eq.f32.partialorder %v238, 8.507059e+37
    %v240 = vand.u32 %v228, 2147483648
    %v241 = vor.u32 1.1754944e-38, %v240
    %v242 = vsel %vm239, %v241, %v237
    %v243 = vmul.f32 1.0, %v242
    %v244 = vxor.u32 %v224, 2147483648
    %v245 = vmul.f32 %v244, 1.442695
    %v246 = vpow.pop %v245
    %v247 = vadd.f32 %v246, 1.0
    %v248 = vrcp.pop %v247
    %v249 = vmul.f32 %v247, %v248
    %v250 = vsub.f32 1.0, %v249
    %v251 = vmul.f32 %v248, %v250
    %v252 = vadd.f32 %v248, %v251
    %vm253 = vweird.f32 %v247
    %vm254 = vweird.f32 %v248
    %vm255 = vmor %vm253, %vm254
    %v256 = vsel %vm255, %v248, %v252
    %v257 = vand.u32 2147483647, %v247
    %vm258 = vcmp.eq.f32.partialorder %v257, 8.507059e+37
    %v259 = vand.u32 %v247, 2147483648
    %v260 = vor.u32 1.1754944e-38, %v259
    %v261 = vsel %vm258, %v260, %v256
    %v262 = vmul.f32 1.0, %v261
    %v263 = vmul.f32 %v243, %v262
    %vm264 = vcmask 7168
    %v265 = vsel %vm264, %v243, %v263
    %vm266 = vcmask 15360
    %267 = vst.msk [vmem:[%s5] sm:$0xff] %vm266, %v265
    // Predicated region
    $region38: #{tpu_custom_call.1} parent=1 // pred_check
      _
    $region39: #{tpu_custom_call.1} parent=1 // pred_check_branch
      %269 = sbr.rel (0) target = $region41
    $region40: #{tpu_custom_call.1} parent=1 // pred_region
      _
    $region41: #{tpu_custom_call.1} parent=1 // pred_fallthru
      _
    // Predicated region
    $region42: #{tpu_custom_call.1} parent=1 // pred_check
      _
    $region43: #{tpu_custom_call.1} parent=1 // pred_check_branch
      %271 = sbr.rel (0) target = $region45
    $region44: #{tpu_custom_call.1} parent=1 // pred_region
      _
    $region45: #{tpu_custom_call.1} parent=1 // pred_fallthru
      _
    %272 = vsyncpa [#allocation3], 1
    %273 = vsyncpa [#allocation6], 1
    %274 = vsyncpa [#allocation4], 1

</llo_original>
